<compile_context>
chip_gen: v7x
topology: tpu7x:2x2x1
jax: 0.10.0
libtpu: 0.0.40
codegen_flags: <defaults>
</compile_context>

<pallas_src>
import functools

import jax
import jax.numpy as jnp
import numpy as np
from jax.experimental import pallas as pl
from jax.experimental.pallas import tpu as pltpu


def _ls_ce_kernel(label_ref, logits_ref, out_ref, *, lb_pos, lb_neg, lb_ignore,
                  num_classes, hw, tile_p, use_mxu):
    lbl = label_ref[0]                                     # (1, TILE_P) int32
    valid = lbl != lb_ignore                               # (1, TILE_P) bool
    if hw % tile_p != 0:
        # Mask out-of-bounds tail columns of the last (partial) pixel tile.
        p = pl.program_id(1)
        pix = p * tile_p + jax.lax.broadcasted_iota(jnp.int32, lbl.shape, 1)
        valid = jnp.logical_and(valid, pix < hw)
    lbl0 = jnp.where(valid, lbl, 0)                        # label[ignore] = 0

    x = logits_ref[0].astype(jnp.float32)                  # (C, TILE_P)
    m = jnp.max(x, axis=0, keepdims=True)                  # (1, TILE_P)   XLU reduce 1
    e = jnp.exp(x - m)                                     # EUP

    # Fused weighted reduction: w_c = smoothed target prob for class c of this pixel.
    cls = jax.lax.broadcasted_iota(jnp.int32, x.shape, 0)  # class id on sublane axis
    w = jnp.where(cls == lbl0, lb_pos, lb_neg)             # (C, TILE_P)
    wx = w * x

    if use_mxu:
        # Large C: offload the class-axis sums to the idle MXU.
        ones = jnp.ones((1, x.shape[0]), jnp.float32)
        se = jnp.dot(ones, e, preferred_element_type=jnp.float32)    # (1, TILE_P)
        wsum = jnp.dot(ones, wx, preferred_element_type=jnp.float32)
    else:
        se = jnp.sum(e, axis=0, keepdims=True)             # XLU reduce 2
        wsum = jnp.sum(wx, axis=0, keepdims=True)          # XLU reduce 3

    lse = m + jnp.log(se)                                  # (1, TILE_P)
    # loss = -sum_c w_c * (x_c - lse) = (sum_c w_c)*lse - sum_c w_c*x_c
    w_total = lb_pos + (num_classes - 1) * lb_neg
    per_pix = w_total * lse - wsum                         # (1, TILE_P)
    per_pix = jnp.where(valid, per_pix, 0.0)               # loss[ignore] = 0
    cnt = jnp.where(valid, 1.0, 0.0)

    # Pack both partials into one lane-dense 128-wide store: lane0=loss, lane1=count.
    lane = jax.lax.broadcasted_iota(jnp.int32, (1, 128), 1)
    packed = jnp.where(lane == 0, jnp.sum(per_pix),
                       jnp.where(lane == 1, jnp.sum(cnt), 0.0))
    out_ref[...] = packed.reshape(1, 1, 1, 128)


def _vmem_config():
    """Returns (vmem_limit_bytes, tile_budget_bytes), generation-aware but safe."""
    cap = 64 * 1024 * 1024            # conservative default: v7x per-TensorCore VMEM
    try:
        cap = int(pltpu.get_tpu_info().vmem_capacity_bytes)
    except Exception:
        pass
    if cap >= 128 * 1024 * 1024:      # v5e / v6e: 128 MiB per TensorCore
        limit = 96 * 1024 * 1024
    else:                             # v7x (64 MiB/TC) or unknown
        limit = 48 * 1024 * 1024
    budget = int(limit * 0.70)        # headroom for outputs + compiler scratch
    return limit, budget


def _choose_tile_p(hw, n, c, itemsize, budget_bytes):
    c_pad = ((c + 7) // 8) * 8        # sublane-padded class rows in VMEM
    # Bytes per pixel column:
    #   2 double-buffered logits tiles (sublane padded, input dtype)
    # + 2 double-buffered int32 label tiles (1 row padded to 8 sublanes)
    # + ~3 f32 working copies of the (C_pad, TILE_P) tile inside the kernel.
    per_col = 2 * c_pad * itemsize + 2 * 8 * 4 + 3 * c_pad * 4
    tp = budget_bytes // per_col
    tp = min(tp, 32768)               # diminishing returns / vreg pressure cap
    hw_up = ((hw + 127) // 128) * 128
    tp = min(tp, hw_up)
    # Keep >= 2 pixel tiles when N == 1 so both v7x TensorCores get work.
    if n == 1 and hw_up > 128:
        tp = min(tp, ((hw_up // 2 + 127) // 128) * 128)
    return int(max(128, (tp // 128) * 128))


def label_smooth_softmax_ce(logits, label, *, lb_smooth=0.1, reduction="mean",
                            lb_ignore=-100, tile_p=None):
    """logits: (N, C, H, W) float; label: (N, H, W) int. Matches the PyTorch module."""
    N, C, H, W = logits.shape
    HW = H * W

    # Native-order reshapes only (no transpose, no padding of logits).
    x = logits.reshape(N, C, HW)
    lbl = label.reshape(N, 1, HW).astype(jnp.int32)

    vmem_limit, budget = _vmem_config()
    if tile_p is None:
        tile_p = _choose_tile_p(HW, N, C, jnp.dtype(logits.dtype).itemsize, budget)
    gp = (HW + tile_p - 1) // tile_p

    lb_pos = 1.0 - lb_smooth
    lb_neg = lb_smooth / C

    kernel = functools.partial(_ls_ce_kernel, lb_pos=lb_pos, lb_neg=lb_neg,
                               lb_ignore=lb_ignore, num_classes=C,
                               hw=HW, tile_p=tile_p, use_mxu=(C >= 128))

    part = pl.pallas_call(
        kernel,
        out_shape=jax.ShapeDtypeStruct((N, gp, 1, 128), jnp.float32),
        grid_spec=pltpu.PrefetchScalarGridSpec(
            num_scalar_prefetch=0,
            grid=(N, gp),
            in_specs=[
                pl.BlockSpec((1, 1, tile_p), lambda n, p: (n, 0, p)),   # labels
                pl.BlockSpec((1, C, tile_p), lambda n, p: (n, 0, p)),   # logits
            ],
            out_specs=pl.BlockSpec((1, 1, 1, 128), lambda n, p: (n, p, 0, 0)),
        ),
        compiler_params=pltpu.CompilerParams(
            dimension_semantics=("parallel", "parallel"),
            vmem_limit_bytes=vmem_limit),
    )(lbl, x)

    loss_sum = jnp.sum(part[..., 0])
    # Per-tile count partials are exact integers <= TILE_P in f32; sum them as int32.
    n_valid = jnp.sum(part[..., 1].astype(jnp.int32))

    if reduction == "mean":
        return loss_sum / n_valid.astype(jnp.float32)  # inf/nan if all ignored (matches PyTorch)
    if reduction == "sum":
        return loss_sum
    # TODO(synk): reduction='none' (per-pixel (N, H, W) loss output) not wired up here.
    raise ValueError(f"unsupported reduction: {reduction}")


def _reference(logits, label, lb_smooth=0.1, lb_ignore=-100):
    # pure-JAX reference for sanity checking
    N, C, H, W = logits.shape
    ignore = label == lb_ignore
    n_valid = jnp.sum(~ignore)
    lbl0 = jnp.where(ignore, 0, label)
    lb_pos, lb_neg = 1.0 - lb_smooth, lb_smooth / C
    onehot = jax.nn.one_hot(lbl0, C, axis=1)
    smoothed = onehot * lb_pos + (1.0 - onehot) * lb_neg
    logs = jax.nn.log_softmax(logits, axis=1)
    loss = -jnp.sum(logs * smoothed, axis=1)
    loss = jnp.where(ignore, 0.0, loss)
    return jnp.sum(loss) / n_valid


if __name__ == "__main__":
    key = jax.random.PRNGKey(0)
    k1, k2, k3 = jax.random.split(key, 3)

    N, C, H, W = 2, 4, 16, 16
    logits = jax.random.normal(k1, (N, C, H, W), dtype=jnp.float32)
    label = jax.random.randint(k2, (N, H, W), 0, C, dtype=jnp.int32)
    # sprinkle in some ignored pixels
    ignore_mask = jax.random.uniform(k3, (N, H, W)) < 0.1
    label = jnp.where(ignore_mask, -100, label)

    out = label_smooth_softmax_ce(logits, label, lb_smooth=0.1,
                                  reduction="mean", lb_ignore=-100)
    out = jax.block_until_ready(out)

    ref = _reference(logits, label)
    np.testing.assert_allclose(np.asarray(out), np.asarray(ref), rtol=1e-4, atol=1e-5)

    print("KERNEL_OK")
</pallas_src>

<mosaic_0001>
module attributes {stable_mosaic.version = 11 : i64} {
  func.func @_ls_ce_kernel(%arg0: i32, %arg1: i32, %arg2: memref<1x1x256xi32, #tpu.memory_space<vmem>>, %arg3: memref<1x4x256xf32, #tpu.memory_space<vmem>>, %arg4: memref<1x1x1x128xf32, #tpu.memory_space<vmem>>) attributes {dimension_semantics = [#tpu.dimension_semantics<parallel>, #tpu.dimension_semantics<parallel>], iteration_bounds = array<i64: 2, 1>, scalar_prefetch = 0 : i64, scratch_operands = 0 : i64, tpu.core_type = #tpu.core_type<tc>, window_params = [{transform_indices = @transform_0, window_bounds = array<i64: 1, 1, 256>}, {transform_indices = @transform_1, window_bounds = array<i64: 1, 4, 256>}, {transform_indices = @transform_2, window_bounds = array<i64: 1, 1, 1, 128>}]} {
    %c0 = arith.constant 0 : index
    %c0_0 = arith.constant 0 : index
    %c0_1 = arith.constant 0 : index
    %0 = vector.load %arg2[%c0, %c0_0, %c0_1] : memref<1x1x256xi32, #tpu.memory_space<vmem>>, vector<1x1x256xi32>
    %1 = vector.shape_cast %0 : vector<1x1x256xi32> to vector<1x256xi32>
    %c-100_i32 = arith.constant -100 : i32
    %2 = vector.broadcast %c-100_i32 : i32 to vector<1x256xi32>
    %3 = arith.cmpi ne, %1, %2 : vector<1x256xi32>
    %c0_i32 = arith.constant 0 : i32
    %4 = vector.broadcast %c0_i32 : i32 to vector<1x256xi32>
    %5 = arith.select %3, %1, %4 : vector<1x256xi1>, vector<1x256xi32>
    %c0_2 = arith.constant 0 : index
    %c0_3 = arith.constant 0 : index
    %c0_4 = arith.constant 0 : index
    %6 = vector.load %arg3[%c0_2, %c0_3, %c0_4] : memref<1x4x256xf32, #tpu.memory_space<vmem>>, vector<1x4x256xf32>
    %7 = vector.shape_cast %6 : vector<1x4x256xf32> to vector<4x256xf32>
    %cst = arith.constant dense<0xFF800000> : vector<256xf32>
    %8 = vector.multi_reduction <maximumf>, %7, %cst [0] : vector<4x256xf32> to vector<256xf32>
    %9 = vector.shape_cast %8 : vector<256xf32> to vector<1x256xf32>
    %10 = vector.broadcast %9 : vector<1x256xf32> to vector<4x256xf32>
    %11 = arith.subf %7, %10 : vector<4x256xf32>
    %12 = math.exp %11 : vector<4x256xf32>
    %13 = tpu.iota {dimensions = array<i32: 0>} : vector<4x256xi32>
    %14 = vector.broadcast %5 : vector<1x256xi32> to vector<4x256xi32>
    %15 = arith.cmpi eq, %13, %14 : vector<4x256xi32>
    %cst_5 = arith.constant 0.899999976 : f32
    %cst_6 = arith.constant 2.500000e-02 : f32
    %16 = vector.broadcast %cst_5 : f32 to vector<4x256xf32>
    %17 = vector.broadcast %cst_6 : f32 to vector<4x256xf32>
    %18 = arith.select %15, %16, %17 : vector<4x256xi1>, vector<4x256xf32>
    %19 = arith.mulf %18, %7 : vector<4x256xf32>
    %cst_7 = arith.constant dense<0.000000e+00> : vector<256xf32>
    %20 = vector.multi_reduction <add>, %12, %cst_7 [0] : vector<4x256xf32> to vector<256xf32>
    %21 = vector.shape_cast %20 : vector<256xf32> to vector<1x256xf32>
    %cst_8 = arith.constant dense<0.000000e+00> : vector<256xf32>
    %22 = vector.multi_reduction <add>, %19, %cst_8 [0] : vector<4x256xf32> to vector<256xf32>
    %23 = vector.shape_cast %22 : vector<256xf32> to vector<1x256xf32>
    %24 = math.log %21 : vector<1x256xf32>
    %25 = arith.addf %9, %24 : vector<1x256xf32>
    %cst_9 = arith.constant 9.750000e-01 : f32
    %26 = vector.broadcast %cst_9 : f32 to vector<1x256xf32>
    %27 = arith.mulf %26, %25 : vector<1x256xf32>
    %28 = arith.subf %27, %23 : vector<1x256xf32>
    %cst_10 = arith.constant 0.000000e+00 : f32
    %29 = vector.broadcast %cst_10 : f32 to vector<1x256xf32>
    %30 = arith.select %3, %28, %29 : vector<1x256xi1>, vector<1x256xf32>
    %cst_11 = arith.constant 1.000000e+00 : f32
    %cst_12 = arith.constant 0.000000e+00 : f32
    %31 = vector.broadcast %cst_11 : f32 to vector<1x256xf32>
    %32 = vector.broadcast %cst_12 : f32 to vector<1x256xf32>
    %33 = arith.select %3, %31, %32 : vector<1x256xi1>, vector<1x256xf32>
    %34 = tpu.iota {dimensions = array<i32: 1>} : vector<1x128xi32>
    %c0_i32_13 = arith.constant 0 : i32
    %35 = vector.broadcast %c0_i32_13 : i32 to vector<1x128xi32>
    %36 = arith.cmpi eq, %34, %35 : vector<1x128xi32>
    %37 = vector.shape_cast %30 : vector<1x256xf32> to vector<1x1x256xf32>
    %cst_14 = arith.constant dense<0.000000e+00> : vector<1xf32>
    %38 = vector.multi_reduction <add>, %37, %cst_14 [1, 2] : vector<1x1x256xf32> to vector<1xf32>
    %39 = vector.shape_cast %38 : vector<1xf32> to vector<1x1x1xf32>
    %40 = vector.extract %39[0, 0, 0] : f32 from vector<1x1x1xf32>
    %c1_i32 = arith.constant 1 : i32
    %41 = vector.broadcast %c1_i32 : i32 to vector<1x128xi32>
    %42 = arith.cmpi eq, %34, %41 : vector<1x128xi32>
    %43 = vector.shape_cast %33 : vector<1x256xf32> to vector<1x1x256xf32>
    %cst_15 = arith.constant dense<0.000000e+00> : vector<1xf32>
    %44 = vector.multi_reduction <add>, %43, %cst_15 [1, 2] : vector<1x1x256xf32> to vector<1xf32>
    %45 = vector.shape_cast %44 : vector<1xf32> to vector<1x1x1xf32>
    %46 = vector.extract %45[0, 0, 0] : f32 from vector<1x1x1xf32>
    %cst_16 = arith.constant 0.000000e+00 : f32
    %47 = vector.broadcast %46 : f32 to vector<1x128xf32>
    %48 = vector.broadcast %cst_16 : f32 to vector<1x128xf32>
    %49 = arith.select %42, %47, %48 : vector<1x128xi1>, vector<1x128xf32>
    %50 = vector.broadcast %40 : f32 to vector<1x128xf32>
    %51 = arith.select %36, %50, %49 : vector<1x128xi1>, vector<1x128xf32>
    %52 = vector.shape_cast %51 : vector<1x128xf32> to vector<1x1x1x128xf32>
    %c0_17 = arith.constant 0 : index
    %c0_18 = arith.constant 0 : index
    %c0_19 = arith.constant 0 : index
    %c0_20 = arith.constant 0 : index
    %53 = vector.load %arg4[%c0_17, %c0_18, %c0_19, %c0_20] : memref<1x1x1x128xf32, #tpu.memory_space<vmem>>, vector<1x1x1x128xf32>
    tpu.vector_store %arg4[%c0_17, %c0_18, %c0_19, %c0_20], %52 {strides = array<i32>} : memref<1x1x1x128xf32, #tpu.memory_space<vmem>>, vector<1x1x1x128xf32>,
    return
  }
  func.func @transform_0(%arg0: i32, %arg1: i32) -> (i32, i32, i32) {
    %c0_i32 = arith.constant 0 : i32
    %c0_i32_0 = arith.constant 0 : i32
    return %arg0, %c0_i32, %arg1 : i32, i32, i32
  }
  func.func @transform_1(%arg0: i32, %arg1: i32) -> (i32, i32, i32) {
    %c0_i32 = arith.constant 0 : i32
    %c0_i32_0 = arith.constant 0 : i32
    return %arg0, %c0_i32, %arg1 : i32, i32, i32
  }
  func.func @transform_2(%arg0: i32, %arg1: i32) -> (i32, i32, i32, i32) {
    %c0_i32 = arith.constant 0 : i32
    %c0_i32_0 = arith.constant 0 : i32
    %c0_i32_1 = arith.constant 0 : i32
    return %arg0, %arg1, %c0_i32, %c0_i32_0 : i32, i32, i32, i32
  }
}

</mosaic_0001>

<llo_original>
// kernel: tpu_custom_call.1
$region0: #{tpu_custom_call.1}
  #allocation0 [shape = 'u32[]', space=smem, size = 0x4, offset = 0x4, fixed_abs, tag = 'smem constant byte address 0x4 - core index']
  #allocation1 [shape = 'u32[144,128]{1,0:T(1,128)}', space=vmem, size = 0x12000, scoped, tag = 'internal scratch']
  %s0 = inlined_call_operand.hbm [shape: s32[2,1,256], index: 0, kind: input, shape index: {}]
  %s1 = inlined_call_operand.hbm [shape: f32[2,4,256], index: 1, kind: input, shape index: {}]
  %s2 = inlined_call_operand.hbm [shape: f32[2,1,1,128], index: 2, kind: output, shape index: {}]
  %s3 = sld [smem:[#allocation0]]
  $region49: #{tpu_custom_call.1} parent=0
    _
  %s5 = ssub.s32 1, %s3
  %s6 = scalar_select 0, %s5, %s3
  $region1: #{tpu_custom_call.1} parent=0
    #allocation2 [shape = 'u8[2048]{0}', space=vmem, size = 0x800, scoped, tag = 'input window, operand 0']
    #allocation3 [shape = 's32[2]{0}', space=sflag, size = 0x8, scoped, tag = 'scoped memory for tpu_custom_call.1']
    #allocation4 [shape = 's32[2]{0}', space=sflag, size = 0x8, scoped, tag = 'scoped memory for tpu_custom_call.1']
    #allocation5 [shape = 'u8[8192]{0}', space=vmem, size = 0x2000, scoped, tag = 'input window, operand 1']
    #allocation6 [shape = 's32[2]{0}', space=sflag, size = 0x8, scoped, tag = 'scoped memory for tpu_custom_call.1']
    #allocation7 [shape = 'u8[1024]{0}', space=vmem, size = 0x400, scoped, tag = 'output window, operand 0']
    %7 = vsyncpa [#allocation3], 0
    %s8 = scalar_lea.sflag [#allocation3], 1
    %9 = vsyncpa %s8, 0
    %10 = vsyncpa [#allocation6], 0
    %s11 = scalar_lea.sflag [#allocation6], 1
    %12 = vsyncpa %s11, 0
    %13 = vsyncpa [#allocation4], 0
    %s14 = scalar_lea.sflag [#allocation4], 1
    %15 = vsyncpa %s14, 0
    loop: start=0, step=1, limit=4
    $region2: #{tpu_custom_call.1} parent=1 // loop_pre_header
      _
    $region3: #{tpu_custom_call.1} parent=1 // loop_header
      %s17 = sphi 0, %s21
      %p18 = scmp.ge.s32.totalorder %s17, 4
      %s24 = sphi 0, %s36
      %s25 = sphi 0, %s32
      %s26 = sphi 0, %s24
      %s27 = sphi 0, %s25
      %s28 = sphi 0, %s26
      %s29 = sphi 0, %s27
      %s41 = sphi 0, %s43
      %s44 = sphi 0, %s41
      %s45 = sphi 0, %s44
      %s61 = sphi 0, %s45
      %s69 = sphi 0, %s71
      %s72 = sphi 0, %s69
      %s73 = sphi 0, %s72
      %s89 = sphi 0, %s73
      %s97 = sphi 0, %s99
      %s100 = sphi 0, %s97
      %s101 = sphi 0, %s100
      %s117 = sphi 0, %s101
    $region4: #{tpu_custom_call.1} parent=1 // loop_header_branch
      %20 = sbr.rel (%p18) target = $region8
    $region5: #{tpu_custom_call.1} parent=1 // loop_body
      %s22 = ssub.s32 %s17, 1
      %s23 = ssub.s32 %s17, 2
      %s30 = sadd.s32 1, %s25
      %p31 = scmp.ge.s32.totalorder %s30, 1
      %s32 = scalar_select %p31, 0, %s30
      %s33 = sadd.s32 1, %s24
      %s34 = scalar_select %p31, %s33, %s24
      %p35 = scmp.ge.s32.totalorder %s34, 2
      %s36 = scalar_select %p35, 0, %s34
      %s37 = ssub.s32 %s24, %s36
      %s38 = ssub.s32 %s25, %s32
      %s39 = sor.u32 %s37, %s38
      %p40 = scmp.eq.s32.totalorder %s39, 0
      %s42 = sadd.s32 %s41, 1
      %s43 = scalar_select %p40, %s41, %s42
      %p46 = pneg %p40
      %p47 = scmp.eq.s32.totalorder %s17, 1
      %p48 = por %p46, %p47
      %p49 = scmp.ne.s32.totalorder %s41, %s44
      %p50 = scmp.eq.s32.totalorder %s17, 0
      %p51 = por %p49, %p50
      %p52 = scmp.ne.s32.totalorder %s41, %s44
      %p53 = scmp.eq.s32.totalorder %s22, 1
      %p54 = por %p52, %p53
      %p55 = scmp.ne.s32.totalorder %s44, %s45
      %p56 = scmp.eq.s32.totalorder %s22, 0
      %p57 = por %p55, %p56
      %p58 = scmp.ne.s32.totalorder %s44, %s45
      %p59 = scmp.eq.s32.totalorder %s23, 1
      %p60 = por %p58, %p59
      %p62 = scmp.ne.s32.totalorder %s45, %s61
      %p63 = scmp.eq.s32.totalorder %s23, 0
      %p64 = por %p62, %p63
      %s65 = ssub.s32 %s24, %s36
      %s66 = ssub.s32 %s25, %s32
      %s67 = sor.u32 %s65, %s66
      %p68 = scmp.eq.s32.totalorder %s67, 0
      %s70 = sadd.s32 %s69, 1
      %s71 = scalar_select %p68, %s69, %s70
      %p74 = pneg %p68
      %p75 = scmp.eq.s32.totalorder %s17, 1
      %p76 = por %p74, %p75
      %p77 = scmp.ne.s32.totalorder %s69, %s72
      %p78 = scmp.eq.s32.totalorder %s17, 0
      %p79 = por %p77, %p78
      %p80 = scmp.ne.s32.totalorder %s69, %s72
      %p81 = scmp.eq.s32.totalorder %s22, 1
      %p82 = por %p80, %p81
      %p83 = scmp.ne.s32.totalorder %s72, %s73
      %p84 = scmp.eq.s32.totalorder %s22, 0
      %p85 = por %p83, %p84
      %p86 = scmp.ne.s32.totalorder %s72, %s73
      %p87 = scmp.eq.s32.totalorder %s23, 1
      %p88 = por %p86, %p87
      %p90 = scmp.ne.s32.totalorder %s73, %s89
      %p91 = scmp.eq.s32.totalorder %s23, 0
      %p92 = por %p90, %p91
      %s93 = ssub.s32 %s24, %s36
      %s94 = ssub.s32 %s25, %s32
      %s95 = sor.u32 %s93, %s94
      %p96 = scmp.eq.s32.totalorder %s95, 0
      %s98 = sadd.s32 %s97, 1
      %s99 = scalar_select %p96, %s97, %s98
      %p102 = pneg %p96
      %p103 = scmp.eq.s32.totalorder %s17, 1
      %p104 = por %p102, %p103
      %p105 = scmp.ne.s32.totalorder %s97, %s100
      %p106 = scmp.eq.s32.totalorder %s17, 0
      %p107 = por %p105, %p106
      %p108 = scmp.ne.s32.totalorder %s97, %s100
      %p109 = scmp.eq.s32.totalorder %s22, 1
      %p110 = por %p108, %p109
      %p111 = scmp.ne.s32.totalorder %s100, %s101
      %p112 = scmp.eq.s32.totalorder %s22, 0
      %p113 = por %p111, %p112
      %p114 = scmp.ne.s32.totalorder %s100, %s101
      %p115 = scmp.eq.s32.totalorder %s23, 1
      %p116 = por %p114, %p115
      %p118 = scmp.ne.s32.totalorder %s101, %s117
      %p119 = scmp.eq.s32.totalorder %s23, 0
      %p120 = por %p118, %p119
      %p121 = scmp.le.s32.totalorder 1, %s17
      %p122 = scmp.lt.s32.totalorder %s17, 3
      %p123 = pnand %p121, %p122
      %p124 = pneg %p123
      // Predicated region
      $region9: #{tpu_custom_call.1} parent=5 // pred_check
        _
      $region10: #{tpu_custom_call.1} parent=5 // pred_check_branch
        %126 = sbr.rel (%p123) target = $region12
      $region11: #{tpu_custom_call.1} parent=5 // pred_region
        %s127 = ssub.s32 %s17, 1
      $region12: #{tpu_custom_call.1} parent=5 // pred_fallthru
        _
      %p128 = scmp.lt.s32.totalorder %s17, 2
      // Predicated region
      $region13: #{tpu_custom_call.1} parent=5 // pred_check
        %p129 = pneg %p128
      $region14: #{tpu_custom_call.1} parent=5 // pred_check_branch
        %131 = sbr.rel (%p129) target = $region16
      $region15: #{tpu_custom_call.1} parent=5 // pred_region
        // Predicated region
        $region17: #{tpu_custom_call.1} parent=15 // pred_check
          %p132 = pneg %p51
        $region18: #{tpu_custom_call.1} parent=15 // pred_check_branch
          %134 = sbr.rel (%p132) target = $region20
        $region19: #{tpu_custom_call.1} parent=15 // pred_region
          %s135 = sand.u32 %s41, 1
          %s136 = scalar_lea.sflag [#allocation3], %s135
          %s137 = sand.u32 %s41, 1
          %s138 = smul.addr %s137, 2
          %s139 = scalar_lea.vmem [#allocation2], %s138
          %s140 = smul.u32 2, %s25
          %s142 = ssub.s32 32, 32
          %143 = vsyncadd %s136, %s142
          %s144 = smul.addr %s24, 2
          %s145 = sadd.s32 %s140, %s144
          %s146 = smul.addr %s145, 16
          %s147 = scalar_lea.hbm %s0, %s146
          %s149 = sshll.u32 %s139, 4
          %s150 = int_to_ptr.vmem [resolvable:$true] %s149
          %152 = dma.hbm_to_vmem [thread:$0]  %s147, 32, %s150, %s136
        $region20: #{tpu_custom_call.1} parent=15 // pred_fallthru
          _
        // Predicated region
        $region21: #{tpu_custom_call.1} parent=15 // pred_check
          %p153 = pneg %p79
        $region22: #{tpu_custom_call.1} parent=15 // pred_check_branch
          %155 = sbr.rel (%p153) target = $region24
        $region23: #{tpu_custom_call.1} parent=15 // pred_region
          %s156 = sand.u32 %s69, 1
          %s157 = scalar_lea.sflag [#allocation6], %s156
          %s158 = sand.u32 %s69, 1
          %s159 = smul.addr %s158, 8
          %s160 = scalar_lea.vmem [#allocation5], %s159
          %s161 = smul.u32 2, %s25
          %s163 = ssub.s32 128, 128
          %164 = vsyncadd %s157, %s163
          %s165 = smul.addr %s24, 2
          %s166 = sadd.s32 %s161, %s165
          %s167 = smul.addr %s166, 64
          %s168 = scalar_lea.hbm %s1, %s167
          %s170 = sshll.u32 %s160, 4
          %s171 = int_to_ptr.vmem [resolvable:$true] %s170
          %173 = dma.hbm_to_vmem [thread:$0]  %s168, 128, %s171, %s157
        $region24: #{tpu_custom_call.1} parent=15 // pred_fallthru
          _
      $region16: #{tpu_custom_call.1} parent=5 // pred_fallthru
        _
      %p174 = scmp.le.s32.totalorder 1, %s17
      %p175 = scmp.lt.s32.totalorder %s17, 3
      %p176 = pnand %p174, %p175
      %p177 = pneg %p176
      // Predicated region
      $region25: #{tpu_custom_call.1} parent=5 // pred_check
        _
      $region26: #{tpu_custom_call.1} parent=5 // pred_check_branch
        %179 = sbr.rel (%p176) target = $region28
      $region27: #{tpu_custom_call.1} parent=5 // pred_region
        %s180 = ssub.s32 %s17, 1
        %s181 = sand.u32 %s44, 1
        %s182 = scalar_lea.sflag [#allocation3], %s181
        %s183 = sand.u32 %s44, 1
        %s184 = smul.addr %s183, 2
        %s185 = scalar_lea.vmem [#allocation2], %s184
        // Predicated region
        $region29: #{tpu_custom_call.1} parent=27 // pred_check
          %p186 = pneg %p57
        $region30: #{tpu_custom_call.1} parent=27 // pred_check_branch
          %188 = sbr.rel (%p186) target = $region32
        $region31: #{tpu_custom_call.1} parent=27 // pred_region
          %189 = dma.done %s182, 32
        $region32: #{tpu_custom_call.1} parent=27 // pred_fallthru
          _
        %s190 = sand.u32 %s72, 1
        %s191 = scalar_lea.sflag [#allocation6], %s190
        %s192 = sand.u32 %s72, 1
        %s193 = smul.addr %s192, 8
        %s194 = scalar_lea.vmem [#allocation5], %s193
        // Predicated region
        $region33: #{tpu_custom_call.1} parent=27 // pred_check
          %p195 = pneg %p85
        $region34: #{tpu_custom_call.1} parent=27 // pred_check_branch
          %197 = sbr.rel (%p195) target = $region36
        $region35: #{tpu_custom_call.1} parent=27 // pred_region
          %198 = dma.done %s191, 128
        $region36: #{tpu_custom_call.1} parent=27 // pred_fallthru
          _
        %s199 = sand.u32 %s44, 1
        %s200 = scalar_lea.sflag [#allocation3], %s199
        %s201 = sand.u32 %s44, 1
        %s202 = smul.addr %s201, 2
        %s203 = scalar_lea.vmem [#allocation2], %s202
        %p204 = pneg %p57
        %p205 = pneg %p54
        %s206 = sand.u32 %s72, 1
        %s207 = scalar_lea.sflag [#allocation6], %s206
        %s208 = sand.u32 %s72, 1
        %s209 = smul.addr %s208, 8
        %s210 = scalar_lea.vmem [#allocation5], %s209
        %p211 = pneg %p85
        %p212 = pneg %p82
        %p213 = pneg %p113
        %p214 = pneg %p110
        %s215 = sand.u32 %s100, 1
        %s216 = scalar_lea.sflag [#allocation4], %s215
        %s217 = sand.u32 %s100, 1
        %s218 = scalar_lea.vmem [#allocation7], %s217
        %s219 = smul.u32 2, %s27
        %s220 = smul.u32 2, %s27
        %v221 = vld [vmem:[%s185] sm:$0x3]
        %vm222 = vcmp.ne.s32.totalorder %v221, 4294967196
        %v223 = vsel %vm222, %v221, 0
        %v224 = vld [vmem:[%s194] sm:$0xff]
        %v226 = vcombine.high %v224, %v224
        %vm228 = vcmask 1043456
        %v229 = vsel %vm228, %v224, -inf
        %v230 = vrot.slane %v229, 4
        %v231 = vmax.f32 %v229, %v230
        %v232 = vrot.slane %v231, 2
        %v233 = vmax.f32 %v231, %v232
        %v234 = vrot.slane %v233, 1
        %v235 = vmax.f32 %v233, %v234
        %v236 = vsel %vm228, %v226, -inf
        %v237 = vrot.slane %v236, 4
        %v238 = vmax.f32 %v236, %v237
        %v239 = vrot.slane %v238, 2
        %v240 = vmax.f32 %v238, %v239
        %v241 = vrot.slane %v240, 1
        %v242 = vmax.f32 %v240, %v241
        %v245 = vcombine.low %v235, %v242
        %v247 = vsub.f32 %v224, %v245
        %v248 = vmul.f32 %v247, 1.442695
        %v249 = vpow.pop %v248
        %v250 = vlaneseq
        %v251 = vshrl.u32 %v250, 7
        %v252 = vlaneseq
        %v253 = vshrl.u32 %v252, 7
        %v254 = vsub.s32 0, %v253
        %v255 = vrot.slane %v223, %v254
        %v256 = vlaneseq
        %v257 = vshrl.u32 %v256, 7
        %v258 = vsub.s32 1, %v257
        %v259 = vrot.slane %v223, %v258
        %vm260 = vcmp.eq.s32.totalorder %v251, %v255
        %vm261 = vcmp.eq.s32.totalorder %v251, %v259
        %v262 = vsel %vm260, 0.9, 0.025
        %v263 = vsel %vm261, 0.9, 0.025
        %v264 = vmul.f32 %v262, %v224
        %v265 = vmul.f32 %v263, %v226
        %v267 = vcombine.high %v249, %v249
        %v269 = vsel %vm228, %v249, 0.0
        %v270 = vrot.slane %v269, 4
        %v271 = vadd.f32 %v269, %v270
        %v272 = vrot.slane %v271, 2
        %v273 = vadd.f32 %v271, %v272
        %v274 = vrot.slane %v273, 1
        %v275 = vadd.f32 %v273, %v274
        %v276 = vsel %vm228, %v267, 0.0
        %v277 = vrot.slane %v276, 4
        %v278 = vadd.f32 %v276, %v277
        %v279 = vrot.slane %v278, 2
        %v280 = vadd.f32 %v278, %v279
        %v281 = vrot.slane %v280, 1
        %v282 = vadd.f32 %v280, %v281
        %v283 = vsel %vm228, %v264, 0.0
        %v284 = vrot.slane %v283, 4
        %v285 = vadd.f32 %v283, %v284
        %v286 = vrot.slane %v285, 2
        %v287 = vadd.f32 %v285, %v286
        %v288 = vrot.slane %v287, 1
        %v289 = vadd.f32 %v287, %v288
        %v290 = vsel %vm228, %v265, 0.0
        %v291 = vrot.slane %v290, 4
        %v292 = vadd.f32 %v290, %v291
        %v293 = vrot.slane %v292, 2
        %v294 = vadd.f32 %v292, %v293
        %v295 = vrot.slane %v294, 1
        %v296 = vadd.f32 %v294, %v295
        %v297 = vlog2.pop %v275
        %v298 = vmul.f32 %v297, 0.6931472
        %v299 = vlog2.pop %v282
        %v300 = vmul.f32 %v299, 0.6931472
        %v301 = vadd.f32 %v235, %v298
        %v302 = vadd.f32 %v242, %v300
        %v303 = vmul.f32 %v301, 0.975
        %v304 = vmul.f32 %v302, 0.975
        %v305 = vsub.f32 %v303, %v289
        %v306 = vsub.f32 %v304, %v296
        %v309 = vcombine.low %v305, %v306
        %v311 = vunpack.c.l.s4 1966171168
        %v312 = vunpack.c.0.s8 %v311
        %v313 = vlaneseq
        %v314 = vshrl.u32 %v313, 7
        %v315 = vsub.s32 %v312, %v314
        %v316 = vrot.slane %v309, %v315
        %v318 = vunpack.c.l.s4 1966171168
        %v319 = vunpack.c.0.s8 %v318
        %v320 = vlaneseq
        %v321 = vshrl.u32 %v320, 7
        %v322 = vsub.s32 %v319, %v321
        %v323 = vrot.slane %v316, %v322
        %v325 = vsel %vm222, %v323, 0.0
        %v326 = vsel %vm222, 1.0, 0.0
        %v327 = vlaneseq
        %v328 = vand.u32 %v327, 127
        %vm329 = vcmp.eq.s32.totalorder %v328, 0
        %v331 = vlaneseq
        %v332 = vshrl.u32 %v331, 7
        %v333 = vsub.s32 0, %v332
        %v334 = vrot.slane %v325, %v333
        %v335 = vlaneseq
        %v336 = vshrl.u32 %v335, 7
        %v337 = vsub.s32 1, %v336
        %v338 = vrot.slane %v325, %v337
        %vm341 = vcmask 1040384
        %v342 = vsel %vm341, %v334, 0.0
        %v343 = vsel %vm341, %v338, 0.0
        %v344 = vadd.f32 %v342, %v343
        %345 = vadd.xlane.f32.xlu0 %v344
        %v346 = vpop.xlane.xlu0 %345
        %v347 = vrot.slane %v346, 4
        %v348 = vadd.f32 %v346, %v347
        %v349 = vrot.slane %v348, 2
        %v350 = vadd.f32 %v348, %v349
        %v351 = vrot.slane %v350, 1
        %v352 = vadd.f32 %v350, %v351
        %s353 = vtos %v352
        %vm354 = vcmp.eq.s32.totalorder %v328, 1
        %v356 = vlaneseq
        %v357 = vshrl.u32 %v356, 7
        %v358 = vsub.s32 0, %v357
        %v359 = vrot.slane %v326, %v358
        %v360 = vlaneseq
        %v361 = vshrl.u32 %v360, 7
        %v362 = vsub.s32 1, %v361
        %v363 = vrot.slane %v326, %v362
        %v366 = vsel %vm341, %v359, 0.0
        %v367 = vsel %vm341, %v363, 0.0
        %v368 = vadd.f32 %v366, %v367
        %369 = vadd.xlane.f32.xlu0 %v368
        %v370 = vpop.xlane.xlu0 %369
        %v371 = vrot.slane %v370, 4
        %v372 = vadd.f32 %v370, %v371
        %v373 = vrot.slane %v372, 2
        %v374 = vadd.f32 %v372, %v373
        %v375 = vrot.slane %v374, 1
        %v376 = vadd.f32 %v374, %v375
        %s377 = vtos %v376
        %v378 = vstv %s377
        %v379 = vsel %vm354, %v378, 0.0
        %v380 = vstv %s353
        %v381 = vsel %vm329, %v380, %v379
        %382 = vst [vmem:[%s218] sm:$0x1] %v381
        %s383 = sand.u32 %s100, 1
        %s384 = scalar_lea.sflag [#allocation4], %s383
        %s385 = sand.u32 %s100, 1
        %s386 = scalar_lea.vmem [#allocation7], %s385
        // Predicated region
        $region37: #{tpu_custom_call.1} parent=27 // pred_check
          %p387 = pneg %p110
        $region38: #{tpu_custom_call.1} parent=27 // pred_check_branch
          %389 = sbr.rel (%p387) target = $region40
        $region39: #{tpu_custom_call.1} parent=27 // pred_region
          %s391 = ssub.s32 16, 16
          %392 = vsyncadd %s384, %s391
          %s393 = sadd.s32 %s27, %s26
          %s394 = smul.addr %s393, 16
          %s395 = scalar_lea.hbm %s2, %s394
          %s397 = sshll.u32 %s386, 4
          %s398 = int_to_ptr.vmem [resolvable:$true] %s397
          %400 = dma.vmem_to_hbm [thread:$0]  %s398, 16, %s395, %s384
        $region40: #{tpu_custom_call.1} parent=27 // pred_fallthru
          _
      $region28: #{tpu_custom_call.1} parent=5 // pred_fallthru
        _
      %p401 = scmp.le.s32.totalorder 2, %s17
      // Predicated region
      $region41: #{tpu_custom_call.1} parent=5 // pred_check
        %p402 = pneg %p401
      $region42: #{tpu_custom_call.1} parent=5 // pred_check_branch
        %404 = sbr.rel (%p402) target = $region44
      $region43: #{tpu_custom_call.1} parent=5 // pred_region
        %s405 = ssub.s32 %s17, 2
        // Predicated region
        $region45: #{tpu_custom_call.1} parent=43 // pred_check
          %p406 = pneg %p116
        $region46: #{tpu_custom_call.1} parent=43 // pred_check_branch
          %408 = sbr.rel (%p406) target = $region48
        $region47: #{tpu_custom_call.1} parent=43 // pred_region
          %s409 = sand.u32 %s101, 1
          %s410 = scalar_lea.sflag [#allocation4], %s409
          %s411 = sand.u32 %s101, 1
          %s412 = scalar_lea.vmem [#allocation7], %s411
          %413 = dma.done %s410, 16
        $region48: #{tpu_custom_call.1} parent=43 // pred_fallthru
          _
      $region44: #{tpu_custom_call.1} parent=5 // pred_fallthru
        _
    $region6: #{tpu_custom_call.1} parent=1 // loop_footer
      %s21 = sadd.s32 1, %s17
    $region7: #{tpu_custom_call.1} parent=1 // loop_footer_branch
      %16 = sbr.rel target = $region3
    $region8: #{tpu_custom_call.1} parent=1 // loop_exit
      _
    %414 = vsyncpa [#allocation3], 1
    %s415 = scalar_lea.sflag [#allocation3], 1
    %416 = vsyncpa %s415, 1
    %417 = vsyncpa [#allocation6], 1
    %s418 = scalar_lea.sflag [#allocation6], 1
    %419 = vsyncpa %s418, 1
    %420 = vsyncpa [#allocation4], 1
    %s421 = scalar_lea.sflag [#allocation4], 1
    %422 = vsyncpa %s421, 1

</llo_original>
